<compile_context>
chip_gen: v5e
topology: v5e:2x2
jax: 0.10.0
libtpu: 0.0.40
codegen_flags: <defaults>
</compile_context>

<pallas_src>
import functools

import jax
import jax.numpy as jnp
from jax import lax
from jax.experimental import pallas as pl
from jax.experimental.pallas import tpu as pltpu

EPS = 1e-5
MOMENTUM = 0.1
# x (padded) must fit in a VMEM scratch to take the fused 1-read path.
# Conservative across v5e/v6e (128 MiB physical) and v7x (64 MiB physical).
FUSED_VMEM_BUDGET = 24 << 20


# ---------------------------------------------------------------------------
# Small helpers
# ---------------------------------------------------------------------------
def _ceil_to(v, m):
    return ((v + m - 1) // m) * m


def _row_align(dtype):
    # Packed sublane tiling: (8,128) f32, (16,128) bf16, (32,128) int8/fp8.
    return {4: 8, 2: 16, 1: 32}.get(jnp.dtype(dtype).itemsize, 8)


def _pick_tile(total, target, align):
    """Largest tile <= target that is a multiple of `align` and divides `total`.
    Falls back to the full dimension (always legal for BlockSpec)."""
    if total <= target or total % align != 0:
        return total
    best = align
    t = align
    while t <= target:
        if total % t == 0:
            best = t
        t += align
    return best


def _pick_row_tile(total_rows, tile_hw, bytes_per_elem, align, block_bytes, cap):
    """Row tile sized so one block is ~block_bytes, dtype-aligned, divides rows."""
    target = max(align, min(cap, block_bytes // max(tile_hw * bytes_per_elem, 1)))
    return _pick_tile(total_rows, target, align)


def _accumulate_tile(xf, sum_acc, sq_acc, tile_hw, lane_chunks):
    """Accumulate per-row sum / sum-of-squares of an f32 (rows, tile_hw) tile.

    lane_chunks=True: pure-VPU accumulation into lane-shaped (rows, 128)
    scratch; the single XLU lane-reduce is deferred to the finalize step.
    """
    if lane_chunks:
        for j in range(tile_hw // 128):
            c = xf[:, 128 * j:128 * (j + 1)]
            sum_acc[...] += c
            sq_acc[...] += c * c
    else:  # tile_hw not a multiple of 128 (full-HW fallback block)
        sum_acc[...] += jnp.sum(xf, axis=1, keepdims=True)
        sq_acc[...] += jnp.sum(xf * xf, axis=1, keepdims=True)


def _reduce_acc(acc_ref, lane_chunks):
    if lane_chunks:
        return jnp.sum(acc_ref[...], axis=1, keepdims=True)
    return acc_ref[...]


# ---------------------------------------------------------------------------
# Fused (VMEM-resident) kernel: grid = (phase, N, hw_tiles)
# ---------------------------------------------------------------------------
def fused_kernel(x_ref, w_ref, b_ref, rm_ref, rv_ref,            # inputs
                 o_ref, rm_out_ref, rv_out_ref,                  # outputs
                 x_keep, sum_acc, sq_acc, mean_scr, inv_std_scr,  # scratch
                 *, tile_hw, inv_n, bias_corr, lane_chunks, eps, momentum):
    p = pl.program_id(0)          # 0 = stats pass (reads x from HBM), 1 = apply
    n = pl.program_id(1)
    t = pl.program_id(2)
    num_n = pl.num_programs(1)
    num_t = pl.num_programs(2)
    slot = n * num_t + t          # location of this tile in the resident scratch

    @pl.when((p == 0) & (n == 0) & (t == 0))
    def _init():
        sum_acc[...] = jnp.zeros_like(sum_acc)
        sq_acc[...] = jnp.zeros_like(sq_acc)

    @pl.when(p == 0)
    def _stats():
        xt = x_ref[0]                                   # (C, tile_hw)
        x_keep[slot] = xt                               # keep resident in VMEM
        _accumulate_tile(xt.astype(jnp.float32), sum_acc, sq_acc,
                         tile_hw, lane_chunks)

    @pl.when((p == 0) & (n == num_n - 1) & (t == num_t - 1))
    def _finalize():
        ch_sum = _reduce_acc(sum_acc, lane_chunks)      # (C, 1)
        ch_sq = _reduce_acc(sq_acc, lane_chunks)        # (C, 1)
        mean = ch_sum * inv_n
        var_b = jnp.maximum(ch_sq * inv_n - mean * mean, 0.0)  # clamp >= 0
        mean_scr[...] = mean
        inv_std_scr[...] = lax.rsqrt(var_b + eps)
        # Running-stat EMA (unbiased variance), applied exactly once.
        rm_out_ref[...] = (1.0 - momentum) * rm_ref[...] + momentum * mean
        rv_out_ref[...] = ((1.0 - momentum) * rv_ref[...]
                           + (momentum * bias_corr) * var_b)

    @pl.when(p == 1)
    def _apply():
        scale = w_ref[0] * inv_std_scr[...]             # (C, 1)
        shift = b_ref[0] - scale * mean_scr[...]        # (C, 1)
        xf = x_keep[slot].astype(jnp.float32)           # (C, tile_hw)
        o_ref[0] = (scale * xf + shift).astype(o_ref.dtype)


def _fused_forward(x3, w, b, rm, rv, *, N, C, H, W, HW, tile_hw, n_hw_tiles,
                   lane_chunks, inv_n, bias_corr, eps, momentum,
                   keep_bytes, blk_bytes):
    x_dtype = x3.dtype
    S = N * n_hw_tiles
    acc_shape = (C, 128) if lane_chunks else (C, 1)

    w3 = w.reshape(N, C, 1)
    b3 = b.reshape(N, C, 1)
    rm2 = rm.reshape(C, 1)
    rv2 = rv.reshape(C, 1)

    vmem_limit = int(min(keep_bytes + 4 * blk_bytes + (8 << 20), 60 << 20))
    x_bytes = N * C * HW * jnp.dtype(x_dtype).itemsize
    cost = pl.CostEstimate(flops=int(7 * N * C * HW),
                           transcendentals=int(C),
                           bytes_accessed=int(2 * x_bytes + 8 * N * C + 24 * C))

    kern = functools.partial(
        fused_kernel, tile_hw=tile_hw, inv_n=inv_n, bias_corr=bias_corr,
        lane_chunks=lane_chunks, eps=eps, momentum=momentum)

    out3, rm_new, rv_new = pl.pallas_call(
        kern,
        out_shape=(jax.ShapeDtypeStruct((N, C, HW), x_dtype),
                   jax.ShapeDtypeStruct((C, 1), jnp.float32),
                   jax.ShapeDtypeStruct((C, 1), jnp.float32)),
        grid=(2, N, n_hw_tiles),
        in_specs=[
            # x: swept during phase 0, frozen at block 0 during phase 1.
            pl.BlockSpec((1, C, tile_hw),
                         lambda p, n, t: (n * (1 - p), 0, t * (1 - p))),
            # per-sample weight / bias: one (C,1) slab per n during phase 1.
            pl.BlockSpec((1, C, 1), lambda p, n, t: (n * p, 0, 0)),
            pl.BlockSpec((1, C, 1), lambda p, n, t: (n * p, 0, 0)),
            pl.BlockSpec((C, 1), lambda p, n, t: (0, 0)),
            pl.BlockSpec((C, 1), lambda p, n, t: (0, 0)),
        ],
        out_specs=(
            # out: pinned at block 0 during phase 0 (never flushed there),
            # swept and written exactly once during phase 1.
            pl.BlockSpec((1, C, tile_hw), lambda p, n, t: (n * p, 0, t * p)),
            pl.BlockSpec((C, 1), lambda p, n, t: (0, 0)),
            pl.BlockSpec((C, 1), lambda p, n, t: (0, 0)),
        ),
        scratch_shapes=[
            pltpu.VMEM((S, C, tile_hw), x_dtype),    # resident copy of x
            pltpu.VMEM(acc_shape, jnp.float32),      # per-channel sum
            pltpu.VMEM(acc_shape, jnp.float32),      # per-channel sum of squares
            pltpu.VMEM((C, 1), jnp.float32),         # batch mean
            pltpu.VMEM((C, 1), jnp.float32),         # rsqrt(var + eps)
        ],
        compiler_params=pltpu.CompilerParams(
            dimension_semantics=("arbitrary", "arbitrary", "arbitrary"),
            vmem_limit_bytes=vmem_limit),
        cost_estimate=cost,
    )(x3, w3, b3, rm2, rv2)

    return out3.reshape(N, C, H, W), rm_new.reshape(C), rv_new.reshape(C)


# ---------------------------------------------------------------------------
# Fallback path (x too large for VMEM): streaming stats + parallel apply.
# ---------------------------------------------------------------------------
def row_stats_kernel(x_ref, sum_ref, sq_ref, sum_acc, sq_acc,
                     *, tile_hw, lane_chunks):
    t = pl.program_id(1)

    @pl.when(t == 0)
    def _init():
        sum_acc[...] = jnp.zeros_like(sum_acc)
        sq_acc[...] = jnp.zeros_like(sq_acc)

    xf = x_ref[...].astype(jnp.float32)              # (tile_r, tile_hw)
    _accumulate_tile(xf, sum_acc, sq_acc, tile_hw, lane_chunks)

    @pl.when(t == pl.num_programs(1) - 1)
    def _emit():
        sum_ref[...] = _reduce_acc(sum_acc, lane_chunks)
        sq_ref[...] = _reduce_acc(sq_acc, lane_chunks)


def apply_kernel(x_ref, scale_ref, shift_ref, o_ref):
    xf = x_ref[...].astype(jnp.float32)              # (tile_r, tile_hw)
    o_ref[...] = (scale_ref[...] * xf + shift_ref[...]).astype(o_ref.dtype)


def _two_phase_forward(x3, w, b, rm, rv, *, N, C, H, W, HW, tile_hw, n_hw_tiles,
                       lane_chunks, inv_n, bias_corr, eps, momentum,
                       itemsize, row_align, hw_pad):
    x_dtype = x3.dtype
    R = N * C
    x2 = x3.reshape(R, HW)

    # ---- Phase 1: streaming per-row sum / sum-of-squares -------------------
    tile_r_s = _pick_row_tile(R, tile_hw, itemsize, row_align, 2 << 20, 256)
    rs_pad = _ceil_to(tile_r_s, row_align)
    acc_shape = (tile_r_s, 128) if lane_chunks else (tile_r_s, 1)
    stats_vmem = int(min(max(2 * rs_pad * hw_pad * itemsize
                             + 6 * rs_pad * 128 * 4 + (4 << 20), 16 << 20),
                         60 << 20))
    stats_cost = pl.CostEstimate(flops=int(3 * R * HW), transcendentals=0,
                                 bytes_accessed=int(R * HW * itemsize + 8 * R))

    row_sum, row_sq = pl.pallas_call(
        functools.partial(row_stats_kernel, tile_hw=tile_hw,
                          lane_chunks=lane_chunks),
        out_shape=(jax.ShapeDtypeStruct((R, 1), jnp.float32),
                   jax.ShapeDtypeStruct((R, 1), jnp.float32)),
        grid=(R // tile_r_s, n_hw_tiles),
        in_specs=[pl.BlockSpec((tile_r_s, tile_hw), lambda r, t: (r, t))],
        out_specs=(pl.BlockSpec((tile_r_s, 1), lambda r, t: (r, 0)),
                   pl.BlockSpec((tile_r_s, 1), lambda r, t: (r, 0))),
        scratch_shapes=[pltpu.VMEM(acc_shape, jnp.float32),
                        pltpu.VMEM(acc_shape, jnp.float32)],
        compiler_params=pltpu.CompilerParams(
            dimension_semantics=("parallel", "arbitrary"),   # megacore-split rows
            vmem_limit_bytes=stats_vmem),
        cost_estimate=stats_cost,
    )(x2)

    # ---- Tiny (N, C)-sized finalize: channel stats, EMA, fused coefficients -
    ch_sum = row_sum.reshape(N, C).sum(axis=0)
    ch_sq = row_sq.reshape(N, C).sum(axis=0)
    mean = ch_sum * inv_n
    var_b = jnp.maximum(ch_sq * inv_n - mean * mean, 0.0)     # clamp >= 0
    inv_std = lax.rsqrt(var_b + eps)
    scale = w * inv_std[None, :]                              # (N, C)
    shift = b - scale * mean[None, :]
    rm_new = (1.0 - momentum) * rm + momentum * mean
    rv_new = (1.0 - momentum) * rv + (momentum * bias_corr) * var_b

    # ---- Phase 2: fully parallel tiled apply  out = scale * x + shift -------
    tile_r_a = _pick_row_tile(R, tile_hw, 2 * itemsize, row_align, 4 << 20, 512)
    ra_pad = _ceil_to(tile_r_a, row_align)
    apply_vmem = int(min(max(4 * ra_pad * hw_pad * itemsize
                             + 8 * ra_pad * 128 * 4 + (4 << 20), 16 << 20),
                         60 << 20))
    apply_cost = pl.CostEstimate(flops=int(2 * R * HW), transcendentals=0,
                                 bytes_accessed=int(2 * R * HW * itemsize + 8 * R))

    # TODO(synk): pass input_output_aliases={0: 0} here when the caller can
    # donate x (drops the second N*C*HW HBM allocation).
    out2 = pl.pallas_call(
        apply_kernel,
        out_shape=jax.ShapeDtypeStruct((R, HW), x_dtype),
        grid=(R // tile_r_a, n_hw_tiles),   # hw-tile axis innermost: scale/shift
        in_specs=[pl.BlockSpec((tile_r_a, tile_hw), lambda r, t: (r, t)),
                  pl.BlockSpec((tile_r_a, 1), lambda r, t: (r, 0)),
                  pl.BlockSpec((tile_r_a, 1), lambda r, t: (r, 0))],
        out_specs=pl.BlockSpec((tile_r_a, tile_hw), lambda r, t: (r, t)),
        compiler_params=pltpu.CompilerParams(
            dimension_semantics=("parallel", "parallel"),
            vmem_limit_bytes=apply_vmem),
        cost_estimate=apply_cost,
    )(x2, scale.reshape(R, 1), shift.reshape(R, 1))

    return out2.reshape(N, C, H, W), rm_new, rv_new


# ---------------------------------------------------------------------------
# Public wrapper
# ---------------------------------------------------------------------------
def bayes_batchnorm2d_mf(x_nchw, weight, bias, running_mean, running_var,
                         *, eps=EPS, momentum=MOMENTUM,
                         fused_vmem_budget=FUSED_VMEM_BUDGET):
    """x_nchw: (N, C, H, W). weight/bias: per-sample (N, C). running_*: (C,).

    Returns (out (N,C,H,W), new_running_mean (C,), new_running_var (C,)).
    """
    N, C, H, W = x_nchw.shape
    HW = H * W
    n_elem = N * HW
    inv_n = 1.0 / float(n_elem)
    bias_corr = float(n_elem) / float(max(n_elem - 1, 1))   # unbiased-var factor

    x_dtype = x_nchw.dtype
    itemsize = jnp.dtype(x_dtype).itemsize
    row_align = _row_align(x_dtype)

    x3 = x_nchw.reshape(N, C, HW)
    w = weight.astype(jnp.float32).reshape(N, C)
    b = bias.astype(jnp.float32).reshape(N, C)
    rm = running_mean.astype(jnp.float32).reshape(C)
    rv = running_var.astype(jnp.float32).reshape(C)

    # Lane tiling of the spatial axis: multiple of 128 that divides HW, else the
    # full dimension (legal; only the trailing partial vreg is masked on store).
    tile_hw = _pick_tile(HW, 2048, 128)
    n_hw_tiles = HW // tile_hw
    lane_chunks = (tile_hw % 128 == 0)

    c_pad = _ceil_to(C, row_align)
    hw_pad = _ceil_to(tile_hw, 128)
    blk_bytes = c_pad * hw_pad * itemsize
    keep_bytes = N * n_hw_tiles * blk_bytes   # padded VMEM cost of keeping x

    if keep_bytes <= fused_vmem_budget:
        return _fused_forward(x3, w, b, rm, rv, N=N, C=C, H=H, W=W, HW=HW,
                              tile_hw=tile_hw, n_hw_tiles=n_hw_tiles,
                              lane_chunks=lane_chunks, inv_n=inv_n,
                              bias_corr=bias_corr, eps=eps, momentum=momentum,
                              keep_bytes=keep_bytes, blk_bytes=blk_bytes)
    return _two_phase_forward(x3, w, b, rm, rv, N=N, C=C, H=H, W=W, HW=HW,
                              tile_hw=tile_hw, n_hw_tiles=n_hw_tiles,
                              lane_chunks=lane_chunks, inv_n=inv_n,
                              bias_corr=bias_corr, eps=eps, momentum=momentum,
                              itemsize=itemsize, row_align=row_align,
                              hw_pad=hw_pad)


if __name__ == "__main__":
    key = jax.random.PRNGKey(0)
    k_x, k_wmu, k_ew, k_eb = jax.random.split(key, 4)

    # Small shapes consistent with a 2D (conv, NCHW) input.
    N, C, H, W = 2, 4, 16, 16
    x = jax.random.normal(k_x, (N, C, H, W), dtype=jnp.float32)

    # Deterministic parameter init matching reset_parameters():
    #   weight_mu ~ U(0,1), weight_log_sigma = -5, bias_mu = 0, bias_log_sigma = -5
    weight_mu = jax.random.uniform(k_wmu, (C,), dtype=jnp.float32)
    weight_log_sigma = jnp.full((C,), -5.0, dtype=jnp.float32)
    bias_mu = jnp.zeros((C,), dtype=jnp.float32)
    bias_log_sigma = jnp.full((C,), -5.0, dtype=jnp.float32)

    running_mean = jnp.zeros((C,), dtype=jnp.float32)
    running_var = jnp.ones((C,), dtype=jnp.float32)

    # single_eps=False, deterministic=False -> per-sample reparameterized (N, C).
    # TODO(synk): the torch.randn reparameterization sampling stays outside the
    # kernel (host-side jax.random), matching the module; kernels consume (N, C).
    eps_w = jax.random.normal(k_ew, (N, C), dtype=jnp.float32)
    eps_b = jax.random.normal(k_eb, (N, C), dtype=jnp.float32)
    weight = weight_mu[None, :] + jnp.exp(weight_log_sigma)[None, :] * eps_w
    bias = bias_mu[None, :] + jnp.exp(bias_log_sigma)[None, :] * eps_b

    # Pure-JAX reference.
    mean_ref = jnp.mean(x, axis=(0, 2, 3))
    var_ref = jnp.var(x, axis=(0, 2, 3))
    xhat_ref = (x - mean_ref[None, :, None, None]) / jnp.sqrt(
        var_ref[None, :, None, None] + EPS)
    out_ref = bias[:, :, None, None] + weight[:, :, None, None] * xhat_ref
    n_elem = N * H * W
    rm_ref = (1 - MOMENTUM) * running_mean + MOMENTUM * mean_ref
    rv_ref = (1 - MOMENTUM) * running_var + MOMENTUM * var_ref * n_elem / (n_elem - 1)

    # Fused (VMEM-resident) path.
    out_f, rm_f, rv_f = bayes_batchnorm2d_mf(x, weight, bias,
                                             running_mean, running_var)
    # Two-call fallback path (forced, to exercise the large-x code path too).
    out_t, rm_t, rv_t = bayes_batchnorm2d_mf(x, weight, bias,
                                             running_mean, running_var,
                                             fused_vmem_budget=0)
    jax.block_until_ready((out_f, rm_f, rv_f, out_t, rm_t, rv_t))

    for o, m, v in ((out_f, rm_f, rv_f), (out_t, rm_t, rv_t)):
        assert jnp.allclose(o, out_ref, atol=1e-4, rtol=1e-4)
        assert jnp.allclose(m, rm_ref, atol=1e-5, rtol=1e-5)
        assert jnp.allclose(v, rv_ref, atol=1e-5, rtol=1e-5)

    print("KERNEL_OK")
</pallas_src>

<mosaic_0001>
module attributes {stable_mosaic.version = 11 : i64} {
  func.func @fused_kernel(%arg0: i32, %arg1: i32, %arg2: i32, %arg3: memref<1x4x256xf32, #tpu.memory_space<vmem>>, %arg4: memref<1x4x1xf32, #tpu.memory_space<vmem>>, %arg5: memref<1x4x1xf32, #tpu.memory_space<vmem>>, %arg6: memref<4x1xf32, #tpu.memory_space<vmem>>, %arg7: memref<4x1xf32, #tpu.memory_space<vmem>>, %arg8: memref<1x4x256xf32, #tpu.memory_space<vmem>>, %arg9: memref<4x1xf32, #tpu.memory_space<vmem>>, %arg10: memref<4x1xf32, #tpu.memory_space<vmem>>, %arg11: memref<2x4x256xf32, #tpu.memory_space<vmem>>, %arg12: memref<4x128xf32, #tpu.memory_space<vmem>>, %arg13: memref<4x128xf32, #tpu.memory_space<vmem>>, %arg14: memref<4x1xf32, #tpu.memory_space<vmem>>, %arg15: memref<4x1xf32, #tpu.memory_space<vmem>>) attributes {dimension_semantics = [#tpu.dimension_semantics<arbitrary>, #tpu.dimension_semantics<arbitrary>, #tpu.dimension_semantics<arbitrary>], iteration_bounds = array<i64: 2, 2, 1>, scalar_prefetch = 0 : i64, scratch_operands = 5 : i64, tpu.core_type = #tpu.core_type<tc>, window_params = [{transform_indices = @transform_0, window_bounds = array<i64: 1, 4, 256>}, {transform_indices = @transform_1, window_bounds = array<i64: 1, 4, 1>}, {transform_indices = @transform_2, window_bounds = array<i64: 1, 4, 1>}, {pipeline_mode = #tpu.pipeline_mode<synchronous>, transform_indices = @transform_3, window_bounds = array<i64: 4, 1>}, {pipeline_mode = #tpu.pipeline_mode<synchronous>, transform_indices = @transform_4, window_bounds = array<i64: 4, 1>}, {transform_indices = @transform_5, window_bounds = array<i64: 1, 4, 256>}, {pipeline_mode = #tpu.pipeline_mode<synchronous>, transform_indices = @transform_6, window_bounds = array<i64: 4, 1>}, {pipeline_mode = #tpu.pipeline_mode<synchronous>, transform_indices = @transform_7, window_bounds = array<i64: 4, 1>}]} {
    %c1_i32 = arith.constant 1 : i32
    %0 = arith.muli %arg1, %c1_i32 : i32
    %1 = arith.addi %0, %arg2 : i32
    %c0_i32 = arith.constant 0 : i32
    %2 = arith.cmpi eq, %arg0, %c0_i32 : i32
    %c0_i32_0 = arith.constant 0 : i32
    %3 = arith.cmpi eq, %arg1, %c0_i32_0 : i32
    %4 = arith.andi %2, %3 : i1
    %c0_i32_1 = arith.constant 0 : i32
    %5 = arith.cmpi eq, %arg2, %c0_i32_1 : i32
    %6 = arith.andi %4, %5 : i1
    %7 = arith.extui %6 : i1 to i32
    %c0_i32_2 = arith.constant 0 : i32
    %8 = arith.cmpi ne, %7, %c0_i32_2 : i32
    scf.if %8 {
      %cst = arith.constant 0.000000e+00 : f32
      %22 = vector.broadcast %cst : f32 to vector<4x128xf32>
      %c0 = arith.constant 0 : index
      %c0_11 = arith.constant 0 : index
      %23 = vector.load %arg12[%c0, %c0_11] : memref<4x128xf32, #tpu.memory_space<vmem>>, vector<4x128xf32>
      tpu.vector_store %arg12[%c0, %c0_11], %22 {strides = array<i32>} : memref<4x128xf32, #tpu.memory_space<vmem>>, vector<4x128xf32>,
      %cst_12 = arith.constant 0.000000e+00 : f32
      %24 = vector.broadcast %cst_12 : f32 to vector<4x128xf32>
      %c0_13 = arith.constant 0 : index
      %c0_14 = arith.constant 0 : index
      %25 = vector.load %arg13[%c0_13, %c0_14] : memref<4x128xf32, #tpu.memory_space<vmem>>, vector<4x128xf32>
      tpu.vector_store %arg13[%c0_13, %c0_14], %24 {strides = array<i32>} : memref<4x128xf32, #tpu.memory_space<vmem>>, vector<4x128xf32>,
    } else {
    }
    %c0_i32_3 = arith.constant 0 : i32
    %9 = arith.cmpi eq, %arg0, %c0_i32_3 : i32
    %10 = arith.extui %9 : i1 to i32
    %c0_i32_4 = arith.constant 0 : i32
    %11 = arith.cmpi ne, %10, %c0_i32_4 : i32
    scf.if %11 {
      %c0 = arith.constant 0 : index
      %c0_11 = arith.constant 0 : index
      %c0_12 = arith.constant 0 : index
      %22 = vector.load %arg3[%c0, %c0_11, %c0_12] : memref<1x4x256xf32, #tpu.memory_space<vmem>>, vector<1x4x256xf32>
      %23 = vector.shape_cast %22 : vector<1x4x256xf32> to vector<4x256xf32>
      %24 = arith.index_cast %1 : i32 to index
      %c0_13 = arith.constant 0 : index
      %c0_14 = arith.constant 0 : index
      %25 = vector.load %arg11[%24, %c0_13, %c0_14] : memref<2x4x256xf32, #tpu.memory_space<vmem>>, vector<1x4x256xf32>
      %26 = vector.shape_cast %25 : vector<1x4x256xf32> to vector<4x256xf32>
      %27 = vector.shape_cast %23 : vector<4x256xf32> to vector<1x4x256xf32>
      tpu.vector_store %arg11[%24, %c0_13, %c0_14], %27 {strides = array<i32>} : memref<2x4x256xf32, #tpu.memory_space<vmem>>, vector<1x4x256xf32>,
      %28 = vector.extract_strided_slice %23 {offsets = [0, 0], sizes = [4, 128], strides = [1, 1]} : vector<4x256xf32> to vector<4x128xf32>
      %c0_15 = arith.constant 0 : index
      %c0_16 = arith.constant 0 : index
      %29 = vector.load %arg12[%c0_15, %c0_16] : memref<4x128xf32, #tpu.memory_space<vmem>>, vector<4x128xf32>
      %30 = arith.addf %29, %28 : vector<4x128xf32>
      %c0_17 = arith.constant 0 : index
      %c0_18 = arith.constant 0 : index
      %31 = vector.load %arg12[%c0_17, %c0_18] : memref<4x128xf32, #tpu.memory_space<vmem>>, vector<4x128xf32>
      tpu.vector_store %arg12[%c0_17, %c0_18], %30 {strides = array<i32>} : memref<4x128xf32, #tpu.memory_space<vmem>>, vector<4x128xf32>,
      %c0_19 = arith.constant 0 : index
      %c0_20 = arith.constant 0 : index
      %32 = vector.load %arg13[%c0_19, %c0_20] : memref<4x128xf32, #tpu.memory_space<vmem>>, vector<4x128xf32>
      %33 = arith.mulf %28, %28 : vector<4x128xf32>
      %34 = arith.addf %32, %33 : vector<4x128xf32>
      %c0_21 = arith.constant 0 : index
      %c0_22 = arith.constant 0 : index
      %35 = vector.load %arg13[%c0_21, %c0_22] : memref<4x128xf32, #tpu.memory_space<vmem>>, vector<4x128xf32>
      tpu.vector_store %arg13[%c0_21, %c0_22], %34 {strides = array<i32>} : memref<4x128xf32, #tpu.memory_space<vmem>>, vector<4x128xf32>,
      %36 = vector.extract_strided_slice %23 {offsets = [0, 128], sizes = [4, 128], strides = [1, 1]} : vector<4x256xf32> to vector<4x128xf32>
      %c0_23 = arith.constant 0 : index
      %c0_24 = arith.constant 0 : index
      %37 = vector.load %arg12[%c0_23, %c0_24] : memref<4x128xf32, #tpu.memory_space<vmem>>, vector<4x128xf32>
      %38 = arith.addf %37, %36 : vector<4x128xf32>
      %c0_25 = arith.constant 0 : index
      %c0_26 = arith.constant 0 : index
      %39 = vector.load %arg12[%c0_25, %c0_26] : memref<4x128xf32, #tpu.memory_space<vmem>>, vector<4x128xf32>
      tpu.vector_store %arg12[%c0_25, %c0_26], %38 {strides = array<i32>} : memref<4x128xf32, #tpu.memory_space<vmem>>, vector<4x128xf32>,
      %c0_27 = arith.constant 0 : index
      %c0_28 = arith.constant 0 : index
      %40 = vector.load %arg13[%c0_27, %c0_28] : memref<4x128xf32, #tpu.memory_space<vmem>>, vector<4x128xf32>
      %41 = arith.mulf %36, %36 : vector<4x128xf32>
      %42 = arith.addf %40, %41 : vector<4x128xf32>
      %c0_29 = arith.constant 0 : index
      %c0_30 = arith.constant 0 : index
      %43 = vector.load %arg13[%c0_29, %c0_30] : memref<4x128xf32, #tpu.memory_space<vmem>>, vector<4x128xf32>
      tpu.vector_store %arg13[%c0_29, %c0_30], %42 {strides = array<i32>} : memref<4x128xf32, #tpu.memory_space<vmem>>, vector<4x128xf32>,
    } else {
    }
    %c0_i32_5 = arith.constant 0 : i32
    %12 = arith.cmpi eq, %arg0, %c0_i32_5 : i32
    %c1_i32_6 = arith.constant 1 : i32
    %13 = arith.cmpi eq, %arg1, %c1_i32_6 : i32
    %14 = arith.andi %12, %13 : i1
    %c0_i32_7 = arith.constant 0 : i32
    %15 = arith.cmpi eq, %arg2, %c0_i32_7 : i32
    %16 = arith.andi %14, %15 : i1
    %17 = arith.extui %16 : i1 to i32
    %c0_i32_8 = arith.constant 0 : i32
    %18 = arith.cmpi ne, %17, %c0_i32_8 : i32
    scf.if %18 {
      %c0 = arith.constant 0 : index
      %c0_11 = arith.constant 0 : index
      %22 = vector.load %arg12[%c0, %c0_11] : memref<4x128xf32, #tpu.memory_space<vmem>>, vector<4x128xf32>
      %cst = arith.constant dense<0.000000e+00> : vector<4xf32>
      %23 = vector.multi_reduction <add>, %22, %cst [1] : vector<4x128xf32> to vector<4xf32>
      %24 = vector.shape_cast %23 : vector<4xf32> to vector<4x1xf32>
      %c0_12 = arith.constant 0 : index
      %c0_13 = arith.constant 0 : index
      %25 = vector.load %arg13[%c0_12, %c0_13] : memref<4x128xf32, #tpu.memory_space<vmem>>, vector<4x128xf32>
      %cst_14 = arith.constant dense<0.000000e+00> : vector<4xf32>
      %26 = vector.multi_reduction <add>, %25, %cst_14 [1] : vector<4x128xf32> to vector<4xf32>
      %27 = vector.shape_cast %26 : vector<4xf32> to vector<4x1xf32>
      %cst_15 = arith.constant 0.001953125 : f32
      %28 = vector.broadcast %cst_15 : f32 to vector<4x1xf32>
      %29 = arith.mulf %24, %28 : vector<4x1xf32>
      %cst_16 = arith.constant 0.001953125 : f32
      %30 = vector.broadcast %cst_16 : f32 to vector<4x1xf32>
      %31 = arith.mulf %27, %30 : vector<4x1xf32>
      %32 = arith.mulf %29, %29 : vector<4x1xf32>
      %33 = arith.subf %31, %32 : vector<4x1xf32>
      %cst_17 = arith.constant 0.000000e+00 : f32
      %34 = vector.broadcast %cst_17 : f32 to vector<4x1xf32>
      %35 = arith.maximumf %33, %34 : vector<4x1xf32>
      %c0_18 = arith.constant 0 : index
      %c0_19 = arith.constant 0 : index
      %36 = vector.load %arg14[%c0_18, %c0_19] : memref<4x1xf32, #tpu.memory_space<vmem>>, vector<4x1xf32>
      tpu.vector_store %arg14[%c0_18, %c0_19], %29 {strides = array<i32>} : memref<4x1xf32, #tpu.memory_space<vmem>>, vector<4x1xf32>,
      %cst_20 = arith.constant 9.99999974E-6 : f32
      %37 = vector.broadcast %cst_20 : f32 to vector<4x1xf32>
      %38 = arith.addf %35, %37 : vector<4x1xf32>
      %39 = math.rsqrt %38 : vector<4x1xf32>
      %c0_21 = arith.constant 0 : index
      %c0_22 = arith.constant 0 : index
      %40 = vector.load %arg15[%c0_21, %c0_22] : memref<4x1xf32, #tpu.memory_space<vmem>>, vector<4x1xf32>
      tpu.vector_store %arg15[%c0_21, %c0_22], %39 {strides = array<i32>} : memref<4x1xf32, #tpu.memory_space<vmem>>, vector<4x1xf32>,
      %c0_23 = arith.constant 0 : index
      %c0_24 = arith.constant 0 : index
      %41 = vector.load %arg6[%c0_23, %c0_24] : memref<4x1xf32, #tpu.memory_space<vmem>>, vector<4x1xf32>
      %cst_25 = arith.constant 0.899999976 : f32
      %42 = vector.broadcast %cst_25 : f32 to vector<4x1xf32>
      %43 = arith.mulf %42, %41 : vector<4x1xf32>
      %cst_26 = arith.constant 1.000000e-01 : f32
      %44 = vector.broadcast %cst_26 : f32 to vector<4x1xf32>
      %45 = arith.mulf %44, %29 : vector<4x1xf32>
      %46 = arith.addf %43, %45 : vector<4x1xf32>
      %c0_27 = arith.constant 0 : index
      %c0_28 = arith.constant 0 : index
      %47 = vector.load %arg9[%c0_27, %c0_28] : memref<4x1xf32, #tpu.memory_space<vmem>>, vector<4x1xf32>
      tpu.vector_store %arg9[%c0_27, %c0_28], %46 {strides = array<i32>} : memref<4x1xf32, #tpu.memory_space<vmem>>, vector<4x1xf32>,
      %c0_29 = arith.constant 0 : index
      %c0_30 = arith.constant 0 : index
      %48 = vector.load %arg7[%c0_29, %c0_30] : memref<4x1xf32, #tpu.memory_space<vmem>>, vector<4x1xf32>
      %cst_31 = arith.constant 0.899999976 : f32
      %49 = vector.broadcast %cst_31 : f32 to vector<4x1xf32>
      %50 = arith.mulf %49, %48 : vector<4x1xf32>
      %cst_32 = arith.constant 0.100195698 : f32
      %51 = vector.broadcast %cst_32 : f32 to vector<4x1xf32>
      %52 = arith.mulf %51, %35 : vector<4x1xf32>
      %53 = arith.addf %50, %52 : vector<4x1xf32>
      %c0_33 = arith.constant 0 : index
      %c0_34 = arith.constant 0 : index
      %54 = vector.load %arg10[%c0_33, %c0_34] : memref<4x1xf32, #tpu.memory_space<vmem>>, vector<4x1xf32>
      tpu.vector_store %arg10[%c0_33, %c0_34], %53 {strides = array<i32>} : memref<4x1xf32, #tpu.memory_space<vmem>>, vector<4x1xf32>,
    } else {
    }
    %c1_i32_9 = arith.constant 1 : i32
    %19 = arith.cmpi eq, %arg0, %c1_i32_9 : i32
    %20 = arith.extui %19 : i1 to i32
    %c0_i32_10 = arith.constant 0 : i32
    %21 = arith.cmpi ne, %20, %c0_i32_10 : i32
    scf.if %21 {
      %c0 = arith.constant 0 : index
      %c0_11 = arith.constant 0 : index
      %c0_12 = arith.constant 0 : index
      %22 = vector.load %arg4[%c0, %c0_11, %c0_12] : memref<1x4x1xf32, #tpu.memory_space<vmem>>, vector<1x4x1xf32>
      %23 = vector.shape_cast %22 : vector<1x4x1xf32> to vector<4x1xf32>
      %c0_13 = arith.constant 0 : index
      %c0_14 = arith.constant 0 : index
      %24 = vector.load %arg15[%c0_13, %c0_14] : memref<4x1xf32, #tpu.memory_space<vmem>>, vector<4x1xf32>
      %25 = arith.mulf %23, %24 : vector<4x1xf32>
      %c0_15 = arith.constant 0 : index
      %c0_16 = arith.constant 0 : index
      %c0_17 = arith.constant 0 : index
      %26 = vector.load %arg5[%c0_15, %c0_16, %c0_17] : memref<1x4x1xf32, #tpu.memory_space<vmem>>, vector<1x4x1xf32>
      %27 = vector.shape_cast %26 : vector<1x4x1xf32> to vector<4x1xf32>
      %c0_18 = arith.constant 0 : index
      %c0_19 = arith.constant 0 : index
      %28 = vector.load %arg14[%c0_18, %c0_19] : memref<4x1xf32, #tpu.memory_space<vmem>>, vector<4x1xf32>
      %29 = arith.mulf %25, %28 : vector<4x1xf32>
      %30 = arith.subf %27, %29 : vector<4x1xf32>
      %31 = arith.index_cast %1 : i32 to index
      %c0_20 = arith.constant 0 : index
      %c0_21 = arith.constant 0 : index
      %32 = vector.load %arg11[%31, %c0_20, %c0_21] : memref<2x4x256xf32, #tpu.memory_space<vmem>>, vector<1x4x256xf32>
      %33 = vector.shape_cast %32 : vector<1x4x256xf32> to vector<4x256xf32>
      %34 = vector.broadcast %25 : vector<4x1xf32> to vector<4x256xf32>
      %35 = arith.mulf %34, %33 : vector<4x256xf32>
      %36 = vector.broadcast %30 : vector<4x1xf32> to vector<4x256xf32>
      %37 = arith.addf %35, %36 : vector<4x256xf32>
      %c0_22 = arith.constant 0 : index
      %c0_23 = arith.constant 0 : index
      %c0_24 = arith.constant 0 : index
      %38 = vector.load %arg8[%c0_22, %c0_23, %c0_24] : memref<1x4x256xf32, #tpu.memory_space<vmem>>, vector<1x4x256xf32>
      %39 = vector.shape_cast %38 : vector<1x4x256xf32> to vector<4x256xf32>
      %40 = vector.shape_cast %37 : vector<4x256xf32> to vector<1x4x256xf32>
      tpu.vector_store %arg8[%c0_22, %c0_23, %c0_24], %40 {strides = array<i32>} : memref<1x4x256xf32, #tpu.memory_space<vmem>>, vector<1x4x256xf32>,
    } else {
    }
    return
  }
  func.func @transform_0(%arg0: i32, %arg1: i32, %arg2: i32) -> (i32, i32, i32) {
    %c1_i32 = arith.constant 1 : i32
    %0 = arith.subi %c1_i32, %arg0 : i32
    %1 = arith.muli %arg1, %0 : i32
    %c1_i32_0 = arith.constant 1 : i32
    %2 = arith.subi %c1_i32_0, %arg0 : i32
    %3 = arith.muli %arg2, %2 : i32
    %c0_i32 = arith.constant 0 : i32
    %c0_i32_1 = arith.constant 0 : i32
    return %1, %c0_i32, %3 : i32, i32, i32
  }
  func.func @transform_1(%arg0: i32, %arg1: i32, %arg2: i32) -> (i32, i32, i32) {
    %0 = arith.muli %arg1, %arg0 : i32
    %c0_i32 = arith.constant 0 : i32
    %c0_i32_0 = arith.constant 0 : i32
    %c0_i32_1 = arith.constant 0 : i32
    return %0, %c0_i32, %c0_i32_0 : i32, i32, i32
  }
  func.func @transform_2(%arg0: i32, %arg1: i32, %arg2: i32) -> (i32, i32, i32) {
    %0 = arith.muli %arg1, %arg0 : i32
    %c0_i32 = arith.constant 0 : i32
    %c0_i32_0 = arith.constant 0 : i32
    %c0_i32_1 = arith.constant 0 : i32
    return %0, %c0_i32, %c0_i32_0 : i32, i32, i32
  }
  func.func @transform_3(%arg0: i32, %arg1: i32, %arg2: i32) -> (i32, i32) {
    %c0_i32 = arith.constant 0 : i32
    %c0_i32_0 = arith.constant 0 : i32
    %c0_i32_1 = arith.constant 0 : i32
    return %c0_i32, %c0_i32_0 : i32, i32
  }
  func.func @transform_4(%arg0: i32, %arg1: i32, %arg2: i32) -> (i32, i32) {
    %c0_i32 = arith.constant 0 : i32
    %c0_i32_0 = arith.constant 0 : i32
    %c0_i32_1 = arith.constant 0 : i32
    return %c0_i32, %c0_i32_0 : i32, i32
  }
  func.func @transform_5(%arg0: i32, %arg1: i32, %arg2: i32) -> (i32, i32, i32) {
    %0 = arith.muli %arg1, %arg0 : i32
    %1 = arith.muli %arg2, %arg0 : i32
    %c0_i32 = arith.constant 0 : i32
    %c0_i32_0 = arith.constant 0 : i32
    return %0, %c0_i32, %1 : i32, i32, i32
  }
  func.func @transform_6(%arg0: i32, %arg1: i32, %arg2: i32) -> (i32, i32) {
    %c0_i32 = arith.constant 0 : i32
    %c0_i32_0 = arith.constant 0 : i32
    %c0_i32_1 = arith.constant 0 : i32
    return %c0_i32, %c0_i32_0 : i32, i32
  }
  func.func @transform_7(%arg0: i32, %arg1: i32, %arg2: i32) -> (i32, i32) {
    %c0_i32 = arith.constant 0 : i32
    %c0_i32_0 = arith.constant 0 : i32
    %c0_i32_1 = arith.constant 0 : i32
    return %c0_i32, %c0_i32_0 : i32, i32
  }
}

</mosaic_0001>

<llo_original>
// kernel: tpu_custom_call.1
$region0: #{tpu_custom_call.1}
  #allocation0 [shape = 'u32[]', space=smem, size = 0x4, offset = 0x4, fixed_abs, tag = 'smem constant byte address 0x4 - core index']
  #allocation1 [shape = 'u32[72,128]{1,0:T(1,128)}', space=vmem, size = 0x9000, scoped, tag = 'internal scratch']
  #allocation2 [shape = 'f32[2,4,256]{2,1,0:T(4,128)}', space=vmem, size = 0x2000, scoped, tag = 'scratch operand']
  #allocation3 [shape = 'f32[4,128]{1,0:T(4,128)}', space=vmem, size = 0x800, scoped, tag = 'scratch operand']
  #allocation4 [shape = 'f32[4,128]{1,0:T(4,128)}', space=vmem, size = 0x800, scoped, tag = 'scratch operand']
  #allocation5 [shape = 'f32[4,1]{1,0:T(4,128)}', space=vmem, size = 0x800, scoped, tag = 'scratch operand']
  #allocation6 [shape = 'f32[4,1]{1,0:T(4,128)}', space=vmem, size = 0x800, scoped, tag = 'scratch operand']
  %s0 = inlined_call_operand.vmem [shape: f32[2,4,256], index: 0, kind: input, shape index: {}]
  %s1 = inlined_call_operand.vmem [shape: f32[2,4,1], index: 1, kind: input, shape index: {}]
  %s2 = inlined_call_operand.vmem [shape: f32[2,4,1], index: 2, kind: input, shape index: {}]
  %s3 = inlined_call_operand.vmem [shape: f32[4,1], index: 3, kind: input, shape index: {}]
  %s4 = inlined_call_operand.vmem [shape: f32[4,1], index: 4, kind: input, shape index: {}]
  %s5 = inlined_call_operand.hbm [shape: f32[2,4,256], index: 5, kind: output, shape index: {0}]
  %s6 = inlined_call_operand.vmem [shape: f32[4,1], index: 6, kind: output, shape index: {1}]
  %s7 = inlined_call_operand.vmem [shape: f32[4,1], index: 7, kind: output, shape index: {2}]
  %8 = xla_tuple %s5, %s6, %s7
  %s9 = sld [smem:[#allocation0]]
  $region85: #{tpu_custom_call.1} parent=0
    _
  %s11 = ssub.s32 1, %s9
  %s12 = scalar_select 0, %s11, %s9
  $region1: #{tpu_custom_call.1} parent=0
    #allocation7 [shape = 'u8[8192]{0}', space=vmem, size = 0x2000, scoped, tag = 'output window, operand 0']
    #allocation8 [shape = 's32[2]{0}', space=sflag, size = 0x8, scoped, tag = 'scoped memory for tpu_custom_call.1']
    %13 = vsyncpa [#allocation8], 0
    %s14 = scalar_lea.sflag [#allocation8], 1
    %15 = vsyncpa %s14, 0
    loop: start=0, step=1, limit=6
    $region2: #{tpu_custom_call.1} parent=1 // loop_pre_header
      _
    $region3: #{tpu_custom_call.1} parent=1 // loop_header
      %s17 = sphi 0, %s21
      %p18 = scmp.ge.s32.totalorder %s17, 6
      %s24 = sphi 0, %s43
      %s25 = sphi 0, %s39
      %s26 = sphi 0, %s35
      %s27 = sphi 0, %s24
      %s28 = sphi 0, %s25
      %s29 = sphi 0, %s26
      %s30 = sphi 0, %s27
      %s31 = sphi 0, %s28
      %s32 = sphi 0, %s29
      %s54 = sphi 0, %s56
      %s57 = sphi 0, %s54
      %s58 = sphi 0, %s57
      %s74 = sphi 0, %s58
      %s82 = sphi 0, %s84
      %s85 = sphi 0, %s82
      %s86 = sphi 0, %s85
      %s102 = sphi 0, %s86
      %s110 = sphi 0, %s112
      %s113 = sphi 0, %s110
      %s114 = sphi 0, %s113
      %s130 = sphi 0, %s114
      %s134 = sphi 0, %s134
      %s136 = sphi 0, %s134
      %s137 = sphi 0, %s136
      %s151 = sphi 0, %s137
      %s155 = sphi 0, %s155
      %s157 = sphi 0, %s155
      %s158 = sphi 0, %s157
      %s172 = sphi 0, %s158
      %s184 = sphi 0, %s186
      %s187 = sphi 0, %s184
      %s188 = sphi 0, %s187
      %s204 = sphi 0, %s188
      %s208 = sphi 0, %s208
      %s210 = sphi 0, %s208
      %s211 = sphi 0, %s210
      %s225 = sphi 0, %s211
      %s229 = sphi 0, %s229
      %s231 = sphi 0, %s229
      %s232 = sphi 0, %s231
      %s246 = sphi 0, %s232
    $region4: #{tpu_custom_call.1} parent=1 // loop_header_branch
      %20 = sbr.rel (%p18) target = $region8
    $region5: #{tpu_custom_call.1} parent=1 // loop_body
      %s22 = ssub.s32 %s17, 1
      %s23 = ssub.s32 %s17, 2
      %s33 = sadd.s32 1, %s26
      %p34 = scmp.ge.s32.totalorder %s33, 1
      %s35 = scalar_select %p34, 0, %s33
      %s36 = sadd.s32 1, %s25
      %s37 = scalar_select %p34, %s36, %s25
      %p38 = scmp.ge.s32.totalorder %s37, 2
      %s39 = scalar_select %p38, 0, %s37
      %s40 = sadd.s32 1, %s24
      %s41 = scalar_select %p38, %s40, %s24
      %p42 = scmp.ge.s32.totalorder %s41, 2
      %s43 = scalar_select %p42, 0, %s41
      %s44 = ssub.s32 1, %s24
      %s45 = smul.u32 %s25, %s44
      %s46 = smul.u32 %s26, %s44
      %s47 = ssub.s32 1, %s43
      %s48 = smul.u32 %s39, %s47
      %s49 = smul.u32 %s35, %s47
      %s50 = ssub.s32 %s45, %s48
      %s51 = ssub.s32 %s46, %s49
      %s52 = sor.u32 %s50, %s51
      %p53 = scmp.eq.s32.totalorder %s52, 0
      %s55 = sadd.s32 %s54, 1
      %s56 = scalar_select %p53, %s54, %s55
      %p59 = pneg %p53
      %p60 = scmp.eq.s32.totalorder %s17, 3
      %p61 = por %p59, %p60
      %p62 = scmp.ne.s32.totalorder %s54, %s57
      %p63 = scmp.eq.s32.totalorder %s17, 0
      %p64 = por %p62, %p63
      %p65 = scmp.ne.s32.totalorder %s54, %s57
      %p66 = scmp.eq.s32.totalorder %s22, 3
      %p67 = por %p65, %p66
      %p68 = scmp.ne.s32.totalorder %s57, %s58
      %p69 = scmp.eq.s32.totalorder %s22, 0
      %p70 = por %p68, %p69
      %p71 = scmp.ne.s32.totalorder %s57, %s58
      %p72 = scmp.eq.s32.totalorder %s23, 3
      %p73 = por %p71, %p72
      %p75 = scmp.ne.s32.totalorder %s58, %s74
      %p76 = scmp.eq.s32.totalorder %s23, 0
      %p77 = por %p75, %p76
      %s78 = smul.u32 %s25, %s24
      %s79 = smul.u32 %s39, %s43
      %s80 = ssub.s32 %s78, %s79
      %p81 = scmp.eq.s32.totalorder %s80, 0
      %s83 = sadd.s32 %s82, 1
      %s84 = scalar_select %p81, %s82, %s83
      %p87 = pneg %p81
      %p88 = scmp.eq.s32.totalorder %s17, 3
      %p89 = por %p87, %p88
      %p90 = scmp.ne.s32.totalorder %s82, %s85
      %p91 = scmp.eq.s32.totalorder %s17, 0
      %p92 = por %p90, %p91
      %p93 = scmp.ne.s32.totalorder %s82, %s85
      %p94 = scmp.eq.s32.totalorder %s22, 3
      %p95 = por %p93, %p94
      %p96 = scmp.ne.s32.totalorder %s85, %s86
      %p97 = scmp.eq.s32.totalorder %s22, 0
      %p98 = por %p96, %p97
      %p99 = scmp.ne.s32.totalorder %s85, %s86
      %p100 = scmp.eq.s32.totalorder %s23, 3
      %p101 = por %p99, %p100
      %p103 = scmp.ne.s32.totalorder %s86, %s102
      %p104 = scmp.eq.s32.totalorder %s23, 0
      %p105 = por %p103, %p104
      %s106 = smul.u32 %s25, %s24
      %s107 = smul.u32 %s39, %s43
      %s108 = ssub.s32 %s106, %s107
      %p109 = scmp.eq.s32.totalorder %s108, 0
      %s111 = sadd.s32 %s110, 1
      %s112 = scalar_select %p109, %s110, %s111
      %p115 = pneg %p109
      %p116 = scmp.eq.s32.totalorder %s17, 3
      %p117 = por %p115, %p116
      %p118 = scmp.ne.s32.totalorder %s110, %s113
      %p119 = scmp.eq.s32.totalorder %s17, 0
      %p120 = por %p118, %p119
      %p121 = scmp.ne.s32.totalorder %s110, %s113
      %p122 = scmp.eq.s32.totalorder %s22, 3
      %p123 = por %p121, %p122
      %p124 = scmp.ne.s32.totalorder %s113, %s114
      %p125 = scmp.eq.s32.totalorder %s22, 0
      %p126 = por %p124, %p125
      %p127 = scmp.ne.s32.totalorder %s113, %s114
      %p128 = scmp.eq.s32.totalorder %s23, 3
      %p129 = por %p127, %p128
      %p131 = scmp.ne.s32.totalorder %s114, %s130
      %p132 = scmp.eq.s32.totalorder %s23, 0
      %p133 = por %p131, %p132
      %s135 = sadd.s32 %s134, 1
      %p138 = scmp.eq.s32.totalorder %s17, 3
      %p139 = scmp.ne.s32.totalorder %s134, %s136
      %p140 = scmp.eq.s32.totalorder %s17, 0
      %p141 = por %p139, %p140
      %p142 = scmp.ne.s32.totalorder %s134, %s136
      %p143 = scmp.eq.s32.totalorder %s22, 3
      %p144 = por %p142, %p143
      %p145 = scmp.ne.s32.totalorder %s136, %s137
      %p146 = scmp.eq.s32.totalorder %s22, 0
      %p147 = por %p145, %p146
      %p148 = scmp.ne.s32.totalorder %s136, %s137
      %p149 = scmp.eq.s32.totalorder %s23, 3
      %p150 = por %p148, %p149
      %p152 = scmp.ne.s32.totalorder %s137, %s151
      %p153 = scmp.eq.s32.totalorder %s23, 0
      %p154 = por %p152, %p153
      %s156 = sadd.s32 %s155, 1
      %p159 = scmp.eq.s32.totalorder %s17, 3
      %p160 = scmp.ne.s32.totalorder %s155, %s157
      %p161 = scmp.eq.s32.totalorder %s17, 0
      %p162 = por %p160, %p161
      %p163 = scmp.ne.s32.totalorder %s155, %s157
      %p164 = scmp.eq.s32.totalorder %s22, 3
      %p165 = por %p163, %p164
      %p166 = scmp.ne.s32.totalorder %s157, %s158
      %p167 = scmp.eq.s32.totalorder %s22, 0
      %p168 = por %p166, %p167
      %p169 = scmp.ne.s32.totalorder %s157, %s158
      %p170 = scmp.eq.s32.totalorder %s23, 3
      %p171 = por %p169, %p170
      %p173 = scmp.ne.s32.totalorder %s158, %s172
      %p174 = scmp.eq.s32.totalorder %s23, 0
      %p175 = por %p173, %p174
      %s176 = smul.u32 %s25, %s24
      %s177 = smul.u32 %s26, %s24
      %s178 = smul.u32 %s39, %s43
      %s179 = smul.u32 %s35, %s43
      %s180 = ssub.s32 %s176, %s178
      %s181 = ssub.s32 %s177, %s179
      %s182 = sor.u32 %s180, %s181
      %p183 = scmp.eq.s32.totalorder %s182, 0
      %s185 = sadd.s32 %s184, 1
      %s186 = scalar_select %p183, %s184, %s185
      %p189 = pneg %p183
      %p190 = scmp.eq.s32.totalorder %s17, 3
      %p191 = por %p189, %p190
      %p192 = scmp.ne.s32.totalorder %s184, %s187
      %p193 = scmp.eq.s32.totalorder %s17, 0
      %p194 = por %p192, %p193
      %p195 = scmp.ne.s32.totalorder %s184, %s187
      %p196 = scmp.eq.s32.totalorder %s22, 3
      %p197 = por %p195, %p196
      %p198 = scmp.ne.s32.totalorder %s187, %s188
      %p199 = scmp.eq.s32.totalorder %s22, 0
      %p200 = por %p198, %p199
      %p201 = scmp.ne.s32.totalorder %s187, %s188
      %p202 = scmp.eq.s32.totalorder %s23, 3
      %p203 = por %p201, %p202
      %p205 = scmp.ne.s32.totalorder %s188, %s204
      %p206 = scmp.eq.s32.totalorder %s23, 0
      %p207 = por %p205, %p206
      %s209 = sadd.s32 %s208, 1
      %p212 = scmp.eq.s32.totalorder %s17, 3
      %p213 = scmp.ne.s32.totalorder %s208, %s210
      %p214 = scmp.eq.s32.totalorder %s17, 0
      %p215 = por %p213, %p214
      %p216 = scmp.ne.s32.totalorder %s208, %s210
      %p217 = scmp.eq.s32.totalorder %s22, 3
      %p218 = por %p216, %p217
      %p219 = scmp.ne.s32.totalorder %s210, %s211
      %p220 = scmp.eq.s32.totalorder %s22, 0
      %p221 = por %p219, %p220
      %p222 = scmp.ne.s32.totalorder %s210, %s211
      %p223 = scmp.eq.s32.totalorder %s23, 3
      %p224 = por %p222, %p223
      %p226 = scmp.ne.s32.totalorder %s211, %s225
      %p227 = scmp.eq.s32.totalorder %s23, 0
      %p228 = por %p226, %p227
      %s230 = sadd.s32 %s229, 1
      %p233 = scmp.eq.s32.totalorder %s17, 3
      %p234 = scmp.ne.s32.totalorder %s229, %s231
      %p235 = scmp.eq.s32.totalorder %s17, 0
      %p236 = por %p234, %p235
      %p237 = scmp.ne.s32.totalorder %s229, %s231
      %p238 = scmp.eq.s32.totalorder %s22, 3
      %p239 = por %p237, %p238
      %p240 = scmp.ne.s32.totalorder %s231, %s232
      %p241 = scmp.eq.s32.totalorder %s22, 0
      %p242 = por %p240, %p241
      %p243 = scmp.ne.s32.totalorder %s231, %s232
      %p244 = scmp.eq.s32.totalorder %s23, 3
      %p245 = por %p243, %p244
      %p247 = scmp.ne.s32.totalorder %s232, %s246
      %p248 = scmp.eq.s32.totalorder %s23, 0
      %p249 = por %p247, %p248
      %p250 = scmp.le.s32.totalorder 1, %s17
      %p251 = scmp.lt.s32.totalorder %s17, 5
      %p252 = pnand %p250, %p251
      %p253 = pneg %p252
      // Predicated region
      $region9: #{tpu_custom_call.1} parent=5 // pred_check
        _
      $region10: #{tpu_custom_call.1} parent=5 // pred_check_branch
        %255 = sbr.rel (%p252) target = $region12
      $region11: #{tpu_custom_call.1} parent=5 // pred_region
        %s256 = ssub.s32 %s17, 1
        // Predicated region
        $region13: #{tpu_custom_call.1} parent=11 // pred_check
          %p257 = pneg %p147
        $region14: #{tpu_custom_call.1} parent=11 // pred_check_branch
          %259 = sbr.rel (%p257) target = $region16
        $region15: #{tpu_custom_call.1} parent=11 // pred_region
          _
        $region16: #{tpu_custom_call.1} parent=11 // pred_fallthru
          _
        // Predicated region
        $region17: #{tpu_custom_call.1} parent=11 // pred_check
          %p260 = pneg %p168
        $region18: #{tpu_custom_call.1} parent=11 // pred_check_branch
          %262 = sbr.rel (%p260) target = $region20
        $region19: #{tpu_custom_call.1} parent=11 // pred_region
          _
        $region20: #{tpu_custom_call.1} parent=11 // pred_fallthru
          _
      $region12: #{tpu_custom_call.1} parent=5 // pred_fallthru
        _
      %p263 = scmp.lt.s32.totalorder %s17, 4
      // Predicated region
      $region21: #{tpu_custom_call.1} parent=5 // pred_check
        %p264 = pneg %p263
      $region22: #{tpu_custom_call.1} parent=5 // pred_check_branch
        %266 = sbr.rel (%p264) target = $region24
      $region23: #{tpu_custom_call.1} parent=5 // pred_region
        // Predicated region
        $region25: #{tpu_custom_call.1} parent=23 // pred_check
          %p267 = pneg %p64
        $region26: #{tpu_custom_call.1} parent=23 // pred_check_branch
          %269 = sbr.rel (%p267) target = $region28
        $region27: #{tpu_custom_call.1} parent=23 // pred_region
          %s270 = ssub.s32 1, %s24
          %s271 = smul.u32 %s25, %s270
          %s272 = smul.u32 %s26, %s270
          %s273 = smul.u32 2, %s272
          %p274 = scmp.lt.s32.totalorder %s271, 1
          %s275 = scalar_select %p274, %s271, 1
          %p276 = scmp.lt.s32.totalorder %s273, 1
          %s277 = scalar_select %p276, %s273, 1
          %s278 = smul.addr %s275, 2
          %s279 = sadd.s32 %s277, %s278
          %s280 = smul.addr %s279, 4
          %s281 = scalar_lea.vmem %s0, %s280
          %s282 = ssub.s32 1, %s24
          %s283 = smul.u32 %s25, %s282
          %s284 = smul.u32 %s26, %s282
          %s285 = smul.u32 2, %s284
        $region28: #{tpu_custom_call.1} parent=23 // pred_fallthru
          _
        // Predicated region
        $region29: #{tpu_custom_call.1} parent=23 // pred_check
          %p286 = pneg %p92
        $region30: #{tpu_custom_call.1} parent=23 // pred_check_branch
          %288 = sbr.rel (%p286) target = $region32
        $region31: #{tpu_custom_call.1} parent=23 // pred_region
          %s289 = smul.u32 %s25, %s24
          %p290 = scmp.lt.s32.totalorder %s289, 1
          %s291 = scalar_select %p290, %s289, 1
          %s292 = smul.addr %s291, 4
          %s293 = scalar_lea.vmem %s1, %s292
          %s294 = smul.u32 %s25, %s24
        $region32: #{tpu_custom_call.1} parent=23 // pred_fallthru
          _
        // Predicated region
        $region33: #{tpu_custom_call.1} parent=23 // pred_check
          %p295 = pneg %p120
        $region34: #{tpu_custom_call.1} parent=23 // pred_check_branch
          %297 = sbr.rel (%p295) target = $region36
        $region35: #{tpu_custom_call.1} parent=23 // pred_region
          %s298 = smul.u32 %s25, %s24
          %p299 = scmp.lt.s32.totalorder %s298, 1
          %s300 = scalar_select %p299, %s298, 1
          %s301 = smul.addr %s300, 4
          %s302 = scalar_lea.vmem %s2, %s301
          %s303 = smul.u32 %s25, %s24
        $region36: #{tpu_custom_call.1} parent=23 // pred_fallthru
          _
      $region24: #{tpu_custom_call.1} parent=5 // pred_fallthru
        _
      %p304 = scmp.le.s32.totalorder 1, %s17
      %p305 = scmp.lt.s32.totalorder %s17, 5
      %p306 = pnand %p304, %p305
      %p307 = pneg %p306
      // Predicated region
      $region37: #{tpu_custom_call.1} parent=5 // pred_check
        _
      $region38: #{tpu_custom_call.1} parent=5 // pred_check_branch
        %309 = sbr.rel (%p306) target = $region40
      $region39: #{tpu_custom_call.1} parent=5 // pred_region
        %s310 = ssub.s32 %s17, 1
        %s311 = ssub.s32 1, %s27
        %s312 = smul.u32 %s28, %s311
        %s313 = smul.u32 %s29, %s311
        %s314 = smul.u32 2, %s313
        %p315 = scmp.lt.s32.totalorder %s312, 1
        %s316 = scalar_select %p315, %s312, 1
        %p317 = scmp.lt.s32.totalorder %s314, 1
        %s318 = scalar_select %p317, %s314, 1
        %s319 = smul.addr %s316, 2
        %s320 = sadd.s32 %s318, %s319
        %s321 = smul.addr %s320, 4
        %s322 = scalar_lea.vmem %s0, %s321
        %p323 = pneg %p70
        %p324 = pneg %p67
        %s325 = smul.u32 %s28, %s27
        %p326 = scmp.lt.s32.totalorder %s325, 1
        %s327 = scalar_select %p326, %s325, 1
        %s328 = smul.addr %s327, 4
        %s329 = scalar_lea.vmem %s1, %s328
        %p330 = pneg %p98
        %p331 = pneg %p95
        %s332 = smul.u32 %s28, %s27
        %p333 = scmp.lt.s32.totalorder %s332, 1
        %s334 = scalar_select %p333, %s332, 1
        %s335 = smul.addr %s334, 4
        %s336 = scalar_lea.vmem %s2, %s335
        %p337 = pneg %p126
        %p338 = pneg %p123
        %p339 = pneg %p147
        %p340 = pneg %p144
        %p341 = pneg %p168
        %p342 = pneg %p165
        %p343 = pneg %p200
        %p344 = pneg %p197
        %s345 = sand.u32 %s187, 1
        %s346 = scalar_lea.sflag [#allocation8], %s345
        %s347 = sand.u32 %s187, 1
        %s348 = smul.addr %s347, 8
        %s349 = scalar_lea.vmem [#allocation7], %s348
        %p350 = pneg %p221
        %p351 = pneg %p218
        %p352 = pneg %p242
        %p353 = pneg %p239
        %s354 = ssub.s32 1, %s27
        %s355 = smul.u32 %s28, %s354
        %s356 = smul.u32 %s29, %s354
        %s357 = smul.u32 2, %s356
        %p358 = scmp.lt.s32.totalorder %s355, 1
        %s359 = scalar_select %p358, %s355, 1
        %p360 = scmp.lt.s32.totalorder %s357, 1
        %s361 = scalar_select %p360, %s357, 1
        %s362 = smul.addr %s359, 2
        %s363 = sadd.s32 %s361, %s362
        %s364 = smul.addr %s363, 4
        %s365 = scalar_lea.vmem %s0, %s364
        %s366 = ssub.s32 1, %s27
        %s367 = smul.u32 %s28, %s366
        %s368 = smul.u32 %s29, %s366
        %s369 = smul.u32 2, %s368
        %s370 = smul.u32 %s28, %s27
        %p371 = scmp.lt.s32.totalorder %s370, 1
        %s372 = scalar_select %p371, %s370, 1
        %s373 = smul.addr %s372, 4
        %s374 = scalar_lea.vmem %s1, %s373
        %s375 = smul.u32 %s28, %s27
        %s376 = smul.u32 %s28, %s27
        %p377 = scmp.lt.s32.totalorder %s376, 1
        %s378 = scalar_select %p377, %s376, 1
        %s379 = smul.addr %s378, 4
        %s380 = scalar_lea.vmem %s2, %s379
        %s381 = smul.u32 %s28, %s27
        %s382 = smul.u32 %s28, %s27
        %s383 = smul.u32 %s29, %s27
        %s384 = smul.u32 2, %s383
        %s385 = sadd.s32 %s28, %s29
        %p386 = scmp.eq.s32.totalorder %s27, 0
        %p387 = scmp.eq.s32.totalorder %s28, 0
        %p388 = pnand %p386, %p387
        %p389 = pneg %p388
        %p390 = scmp.eq.s32.totalorder %s29, 0
        %p391 = pnand %p389, %p390
        %p392 = pneg %p391
        // Predicated region
        $region41: #{tpu_custom_call.1} parent=39 // pred_check
          _
        $region42: #{tpu_custom_call.1} parent=39 // pred_check_branch
          %394 = sbr.rel (%p391) target = $region44
        $region43: #{tpu_custom_call.1} parent=39 // pred_region
          %395 = vst [vmem:[#allocation3] sm:$0xf] 0.0
          %396 = vst [vmem:[#allocation4] sm:$0xf] 0.0
        $region44: #{tpu_custom_call.1} parent=39 // pred_fallthru
          _
        // Predicated region
        $region45: #{tpu_custom_call.1} parent=39 // pred_check
          %p397 = pneg %p386
        $region46: #{tpu_custom_call.1} parent=39 // pred_check_branch
          %399 = sbr.rel (%p397) target = $region48
        $region47: #{tpu_custom_call.1} parent=39 // pred_region
          %v400 = vld [vmem:[%s365] sm:$0xff]
          %s401 = smul.u32 %s385, 2
          %s402 = smul.addr %s401, 4
          %s403 = scalar_lea.vmem [#allocation2], %s402
          %404 = vst [vmem:[%s403] sm:$0xff] %v400
          %v405 = vld [vmem:[#allocation3] sm:$0xf]
          %v406 = vadd.f32 %v405, %v400
          %407 = vst [vmem:[#allocation3] sm:$0xf] %v406
          %v408 = vld [vmem:[#allocation4] sm:$0xf]
          %v409 = vmul.f32 %v400, %v400
          %v410 = vadd.f32 %v408, %v409
          %411 = vst [vmem:[#allocation4] sm:$0xf] %v410
          %v412 = vld [vmem:[#allocation3] sm:$0xf]
          %414 = vst [vmem:[#allocation1] ss:$2 sm:$0xff] %v400
          %v415 = vld.sshfl [vmem:[#allocation1 + $0x8] sm:$0xff pattern:$0x75316420]
          %v417 = vadd.f32 %v412, %v415
          %418 = vst [vmem:[#allocation3] sm:$0xf] %v417
          %v419 = vld [vmem:[#allocation4] sm:$0xf]
          %v420 = vrot.slane %v400, 4
          %v422 = vmul.f32 %v420, %v420
          %v423 = vadd.f32 %v419, %v422
          %424 = vst [vmem:[#allocation4] sm:$0xf] %v423
        $region48: #{tpu_custom_call.1} parent=39 // pred_fallthru
          _
        %p425 = scmp.eq.s32.totalorder %s28, 1
        %p426 = pnand %p386, %p425
        %p427 = pneg %p426
        %p428 = pnand %p427, %p390
        %p429 = pneg %p428
        // Predicated region
        $region49: #{tpu_custom_call.1} parent=39 // pred_check
          _
        $region50: #{tpu_custom_call.1} parent=39 // pred_check_branch
          %431 = sbr.rel (%p428) target = $region52
        $region51: #{tpu_custom_call.1} parent=39 // pred_region
          %v432 = vld [vmem:[#allocation3] sm:$0xf]
          %vm433 = vcmask 1043456
          %v434 = vsel %vm433, %v432, 0.0
          %435 = vadd.xlane.f32.xlu0 %v434
          %v436 = vpop.xlane.xlu0 %435
          %v437 = vld [vmem:[#allocation4] sm:$0xf]
          %v438 = vsel %vm433, %v437, 0.0
          %439 = vadd.xlane.f32.xlu0 %v438
          %v440 = vpop.xlane.xlu0 %439
          %v441 = vmul.f32 %v436, 0.001953125
          %v442 = vmul.f32 %v440, 0.001953125
          %v443 = vmul.f32 %v441, %v441
          %v444 = vsub.f32 %v442, %v443
          %v445 = vmax.f32 %v444, 0.0
          %vm446 = vcmask 3072
          %447 = vst.msk [vmem:[#allocation5] sm:$0xf] %vm446, %v441
          %v448 = vadd.f32 %v445, 1e-05
          %v449 = vrsqrt.pop %v448
          %v450 = vmul.f32 %v449, %v448
          %v451 = vmul.f32 %v450, %v449
          %v452 = vmul.f32 0.5, %v451
          %v453 = vsub.f32 1.5, %v452
          %v454 = vmul.f32 %v449, %v453
          %vm455 = vweird.f32 %v448
          %vm456 = vweird.f32 %v449
          %vm457 = vmor %vm455, %vm456
          %v458 = vsel %vm457, %v449, %v454
          %459 = vst.msk [vmem:[#allocation6] sm:$0xf] %vm446, %v458
          %v460 = vld [vmem:[%s3] sm:$0xf]
          %v461 = vmul.f32 %v460, 0.9
          %v462 = vmul.f32 %v441, 0.1
          %v463 = vadd.f32 %v461, %v462
          %464 = vst.msk [vmem:[%s6] sm:$0xf] %vm446, %v463
          %v465 = vld [vmem:[%s4] sm:$0xf]
          %v466 = vmul.f32 %v465, 0.9
          %v467 = vmul.f32 %v445, 0.1001957
          %v468 = vadd.f32 %v466, %v467
          %469 = vst.msk [vmem:[%s7] sm:$0xf] %vm446, %v468
        $region52: #{tpu_custom_call.1} parent=39 // pred_fallthru
          _
        %p470 = scmp.eq.s32.totalorder %s27, 1
        // Predicated region
        $region53: #{tpu_custom_call.1} parent=39 // pred_check
          %p471 = pneg %p470
        $region54: #{tpu_custom_call.1} parent=39 // pred_check_branch
          %473 = sbr.rel (%p471) target = $region56
        $region55: #{tpu_custom_call.1} parent=39 // pred_region
          %v474 = vld [vmem:[%s374] sm:$0xf]
          %v475 = vld [vmem:[#allocation6] sm:$0xf]
          %v476 = vmul.f32 %v474, %v475
          %v477 = vld [vmem:[%s380] sm:$0xf]
          %v478 = vld [vmem:[#allocation5] sm:$0xf]
          %v479 = vmul.f32 %v476, %v478
          %v480 = vsub.f32 %v477, %v479
          %s481 = smul.u32 %s385, 2
          %s482 = smul.addr %s481, 4
          %s483 = scalar_lea.vmem [#allocation2], %s482
          %v484 = vld [vmem:[%s483] sm:$0xff]
          %486 = vset.pattern.permute.xlu0 0
          %487 = vperm.xlu0 %486, %v476
          %v488 = vpop.permute.xlu0 %487
          %491 = vst [vmem:[#allocation1] ss:$2 sm:$0xff] %v484
          %v492 = vld.sshfl [vmem:[#allocation1] sm:$0xff pattern:$0x75316420]
          %v493 = vld.sshfl [vmem:[#allocation1 + $0x8] sm:$0xff pattern:$0x75316420]
          %v496 = vmul.f32 %v488, %v492
          %v497 = vmul.f32 %v488, %v493
          %499 = vset.pattern.permute.xlu0 0
          %500 = vperm.xlu0 %499, %v480
          %v501 = vpop.permute.xlu0 %500
          %v503 = vadd.f32 %v496, %v501
          %v504 = vadd.f32 %v497, %v501
          %v507 = vrot.slane %v504, 4
          %vm508 = vcmask 1043456
          %v509 = vsel %vm508, %v503, %v507
          %511 = vst [vmem:[%s349] sm:$0xff] %v509
        $region56: #{tpu_custom_call.1} parent=39 // pred_fallthru
          _
        %s512 = sand.u32 %s187, 1
        %s513 = scalar_lea.sflag [#allocation8], %s512
        %s514 = sand.u32 %s187, 1
        %s515 = smul.addr %s514, 8
        %s516 = scalar_lea.vmem [#allocation7], %s515
        // Predicated region
        $region57: #{tpu_custom_call.1} parent=39 // pred_check
          %p517 = pneg %p197
        $region58: #{tpu_custom_call.1} parent=39 // pred_check_branch
          %519 = sbr.rel (%p517) target = $region60
        $region59: #{tpu_custom_call.1} parent=39 // pred_region
          %s520 = smul.u32 %s28, %s27
          %s521 = smul.u32 %s29, %s27
          %s522 = smul.u32 2, %s521
          %524 = vsyncadd %s513, 0
          %s525 = smul.addr %s520, 2
          %s526 = sadd.s32 %s522, %s525
          %s527 = smul.addr %s526, 4
          %s528 = scalar_lea.hbm %s5, %s527
          %s530 = sshll.u32 %s516, 4
          %s531 = int_to_ptr.vmem [resolvable:$true] %s530
          %s532 = sshll.u32 %s528, 4
          %s533 = int_to_ptr.hbm [resolvable:$true] %s532
          %535 = dma.vmem_to_hbm [thread:$0]  %s531, 128, %s533, %s513
        $region60: #{tpu_custom_call.1} parent=39 // pred_fallthru
          _
        // Predicated region
        $region61: #{tpu_custom_call.1} parent=39 // pred_check
          %p536 = pneg %p218
        $region62: #{tpu_custom_call.1} parent=39 // pred_check_branch
          %538 = sbr.rel (%p536) target = $region64
        $region63: #{tpu_custom_call.1} parent=39 // pred_region
          _
        $region64: #{tpu_custom_call.1} parent=39 // pred_fallthru
          _
        // Predicated region
        $region65: #{tpu_custom_call.1} parent=39 // pred_check
          %p539 = pneg %p239
        $region66: #{tpu_custom_call.1} parent=39 // pred_check_branch
          %541 = sbr.rel (%p539) target = $region68
        $region67: #{tpu_custom_call.1} parent=39 // pred_region
          _
        $region68: #{tpu_custom_call.1} parent=39 // pred_fallthru
          _
        // Predicated region
        $region69: #{tpu_custom_call.1} parent=39 // pred_check
          %p542 = pneg %p218
        $region70: #{tpu_custom_call.1} parent=39 // pred_check_branch
          %544 = sbr.rel (%p542) target = $region72
        $region71: #{tpu_custom_call.1} parent=39 // pred_region
          _
        $region72: #{tpu_custom_call.1} parent=39 // pred_fallthru
          _
        // Predicated region
        $region73: #{tpu_custom_call.1} parent=39 // pred_check
          %p545 = pneg %p239
        $region74: #{tpu_custom_call.1} parent=39 // pred_check_branch
          %547 = sbr.rel (%p545) target = $region76
        $region75: #{tpu_custom_call.1} parent=39 // pred_region
          _
        $region76: #{tpu_custom_call.1} parent=39 // pred_fallthru
          _
      $region40: #{tpu_custom_call.1} parent=5 // pred_fallthru
        _
      %p548 = scmp.le.s32.totalorder 2, %s17
      // Predicated region
      $region77: #{tpu_custom_call.1} parent=5 // pred_check
        %p549 = pneg %p548
      $region78: #{tpu_custom_call.1} parent=5 // pred_check_branch
        %551 = sbr.rel (%p549) target = $region80
      $region79: #{tpu_custom_call.1} parent=5 // pred_region
        %s552 = ssub.s32 %s17, 2
        // Predicated region
        $region81: #{tpu_custom_call.1} parent=79 // pred_check
          %p553 = pneg %p203
        $region82: #{tpu_custom_call.1} parent=79 // pred_check_branch
          %555 = sbr.rel (%p553) target = $region84
        $region83: #{tpu_custom_call.1} parent=79 // pred_region
          %s556 = sand.u32 %s188, 1
          %s557 = scalar_lea.sflag [#allocation8], %s556
          %s558 = sand.u32 %s188, 1
          %s559 = smul.addr %s558, 8
          %s560 = scalar_lea.vmem [#allocation7], %s559
          %562 = dma.done %s557, 128
        $region84: #{tpu_custom_call.1} parent=79 // pred_fallthru
          _
      $region80: #{tpu_custom_call.1} parent=5 // pred_fallthru
        _
    $region6: #{tpu_custom_call.1} parent=1 // loop_footer
      %s21 = sadd.s32 1, %s17
    $region7: #{tpu_custom_call.1} parent=1 // loop_footer_branch
      %16 = sbr.rel target = $region3
    $region8: #{tpu_custom_call.1} parent=1 // loop_exit
      _
    %563 = vsyncpa [#allocation8], 1
    %s564 = scalar_lea.sflag [#allocation8], 1
    %565 = vsyncpa %s564, 1

</llo_original>
